<compile_context>
chip_gen: v6e
topology: v6e:2x2x1
jax: 0.10.0
libtpu: 0.0.40
codegen_flags: <defaults>
</compile_context>

<pallas_src>
import math
from functools import partial

import jax
import jax.numpy as jnp
from jax import lax
from jax.experimental import pallas as pl
from jax.experimental.pallas import tpu as pltpu


# ----------------------------- slope schedule ------------------------------ #

def get_alibi_slopes(heads):
    """Python port of AlibiPositionalBias._get_slopes (static, host-side)."""
    def pow2(n):
        start = 2 ** (-2 ** (-(math.log2(n) - 3)))
        return [start * start ** i for i in range(n)]
    if math.log2(heads).is_integer():
        return pow2(heads)
    c = 2 ** math.floor(math.log2(heads))
    return pow2(c) + pow2(2 * c)[0::2][: heads - c]


# ------------------------------ Pallas kernel ------------------------------ #

def _alibi_bias_kernel(slopes_ref, bias_ref, *, seq_i, seq_j):
    """One grid step per head: bias[h] = slopes[h] * -|j_arange - i_arange|."""
    h = pl.program_id(0)
    # i_arange = arange(j - i, j), j_arange = arange(j)  (matches get_bias()).
    rows = lax.broadcasted_iota(jnp.int32, (seq_i, seq_j), 0) + (seq_j - seq_i)
    cols = lax.broadcasted_iota(jnp.int32, (seq_i, seq_j), 1)
    alibi = -jnp.abs(cols - rows).astype(jnp.float32)
    bias_ref[0] = alibi * slopes_ref[h]            # scalar slope from SMEM


def alibi_bias(slopes, num_heads, seq_i, seq_j):
    """Compute the (num_heads, seq_i, seq_j) ALiBi bias with a Pallas kernel.

    Heads beyond len(slopes) get zero slope, i.e. zero bias, which is exactly
    the F.pad(..., (0, 0, 0, 0, 0, num_heads_unalibied)) in the torch module.
    """
    n_alibi = slopes.shape[0]
    slopes_padded = jnp.zeros((num_heads,), jnp.float32).at[:n_alibi].set(
        slopes.astype(jnp.float32))

    kernel = partial(_alibi_bias_kernel, seq_i=seq_i, seq_j=seq_j)
    return pl.pallas_call(
        kernel,
        out_shape=jax.ShapeDtypeStruct((num_heads, seq_i, seq_j), jnp.float32),
        grid=(num_heads,),
        in_specs=[pl.BlockSpec((num_heads,), lambda h: (0,),
                               memory_space=pltpu.MemorySpace.SMEM)],
        out_specs=pl.BlockSpec((1, seq_i, seq_j), lambda h: (h, 0, 0)),
        compiler_params=pltpu.CompilerParams(
            dimension_semantics=("parallel",)),
    )(slopes_padded)


def alibi_positional_bias_forward(sim, slopes):
    """Pallas port of AlibiPositionalBias.forward: sim (..., h, i, j) -> bias (h, i, j)."""
    h, i, j = sim.shape[-3:]
    return alibi_bias(slopes, h, i, j)


# --------------------------- pure-JAX reference ----------------------------- #

def _ref_alibi_forward(sim, slopes):
    h, i, j = sim.shape[-3:]
    i_arange = jnp.arange(j - i, j)
    j_arange = jnp.arange(j)
    bias = -jnp.abs(j_arange[None, None, :] - i_arange[None, :, None]).astype(jnp.float32)
    bias = bias * slopes.reshape(-1, 1, 1)                 # (len(slopes), i, j)
    pad = h - bias.shape[0]
    if pad > 0:
        bias = jnp.concatenate([bias, jnp.zeros((pad, i, j), jnp.float32)], axis=0)
    return bias


# ---------------------------------- Main ------------------------------------ #

if __name__ == "__main__":
    key = jax.random.PRNGKey(0)

    # Case 1: typical usage — heads == len(slopes), lane-aligned (i, j).
    B, heads, seq_i, seq_j = 2, 8, 64, 128
    slopes = jnp.asarray(get_alibi_slopes(heads), jnp.float32)
    sim = jax.random.normal(key, (B, heads, seq_i, seq_j), jnp.float32)

    bias = jax.block_until_ready(alibi_positional_bias_forward(sim, slopes))
    ref = _ref_alibi_forward(sim, slopes)
    assert bias.shape == (heads, seq_i, seq_j)
    err = float(jnp.max(jnp.abs(bias - ref)))
    assert jnp.allclose(bias, ref, atol=1e-6, rtol=1e-6), f"case1 max abs err {err}"

    # The bias broadcasts onto sim exactly like in the attention module.
    biased = jax.block_until_ready(sim + bias[None])
    assert biased.shape == sim.shape

    # Case 2: non-power-of-2 slope count + unalibied-head padding + unaligned i, j.
    heads2, n_slopes2, i2, j2 = 6, 3, 24, 40
    slopes2 = jnp.asarray(get_alibi_slopes(n_slopes2), jnp.float32)
    sim2 = jax.random.normal(jax.random.PRNGKey(1), (1, heads2, i2, j2), jnp.float32)

    bias2 = jax.block_until_ready(alibi_positional_bias_forward(sim2, slopes2))
    ref2 = _ref_alibi_forward(sim2, slopes2)
    assert bias2.shape == (heads2, i2, j2)
    err2 = float(jnp.max(jnp.abs(bias2 - ref2)))
    assert jnp.allclose(bias2, ref2, atol=1e-6, rtol=1e-6), f"case2 max abs err {err2}"

    print("KERNEL_OK")
</pallas_src>

<mosaic_0001>
module attributes {stable_mosaic.version = 11 : i64} {
  func.func @_alibi_bias_kernel(%arg0: i32, %arg1: memref<8xf32, #tpu.memory_space<smem>>, %arg2: memref<1x64x128xf32, #tpu.memory_space<vmem>>) attributes {dimension_semantics = [#tpu.dimension_semantics<parallel>], iteration_bounds = array<i64: 8>, scalar_prefetch = 0 : i64, scratch_operands = 0 : i64, tpu.core_type = #tpu.core_type<tc>, window_params = [{transform_indices = @transform_0, window_bounds = array<i64: 8>}, {transform_indices = @transform_1, window_bounds = array<i64: 1, 64, 128>}]} {
    %0 = tpu.iota {dimensions = array<i32: 0>} : vector<64x128xi32>
    %c64_i32 = arith.constant 64 : i32
    %1 = vector.broadcast %c64_i32 : i32 to vector<64x128xi32>
    %2 = arith.addi %0, %1 : vector<64x128xi32>
    %3 = tpu.iota {dimensions = array<i32: 1>} : vector<64x128xi32>
    %4 = arith.subi %3, %2 : vector<64x128xi32>
    %5 = math.absi %4 : vector<64x128xi32>
    %6 = arith.sitofp %5 : vector<64x128xi32> to vector<64x128xf32>
    %cst = arith.constant 0.000000e+00 : f32
    %7 = vector.broadcast %cst : f32 to vector<64x128xf32>
    %8 = arith.subf %7, %6 : vector<64x128xf32>
    %9 = arith.index_cast %arg0 : i32 to index
    %10 = memref.load %arg1[%9] : memref<8xf32, #tpu.memory_space<smem>>
    %11 = vector.broadcast %10 : f32 to vector<64x128xf32>
    %12 = arith.mulf %8, %11 : vector<64x128xf32>
    %c0 = arith.constant 0 : index
    %c0_0 = arith.constant 0 : index
    %c0_1 = arith.constant 0 : index
    %13 = vector.load %arg2[%c0, %c0_0, %c0_1] : memref<1x64x128xf32, #tpu.memory_space<vmem>>, vector<1x64x128xf32>
    %14 = vector.shape_cast %13 : vector<1x64x128xf32> to vector<64x128xf32>
    %15 = vector.shape_cast %12 : vector<64x128xf32> to vector<1x64x128xf32>
    tpu.vector_store %arg2[%c0, %c0_0, %c0_1], %15 {strides = array<i32>} : memref<1x64x128xf32, #tpu.memory_space<vmem>>, vector<1x64x128xf32>,
    return
  }
  func.func @transform_0(%arg0: i32) -> i32 {
    %c0_i32 = arith.constant 0 : i32
    %c0_i32_0 = arith.constant 0 : i32
    return %c0_i32 : i32
  }
  func.func @transform_1(%arg0: i32) -> (i32, i32, i32) {
    %c0_i32 = arith.constant 0 : i32
    %c0_i32_0 = arith.constant 0 : i32
    %c0_i32_1 = arith.constant 0 : i32
    return %arg0, %c0_i32, %c0_i32_0 : i32, i32, i32
  }
}

</mosaic_0001>

<llo_original>
// kernel: tpu_custom_call.1
$region0: #{tpu_custom_call.1}
  #allocation0 [shape = 'u32[]', space=smem, size = 0x4, offset = 0x4, fixed_abs, tag = 'smem constant byte address 0x4 - core index']
  #allocation1 [shape = 'u32[144,128]{1,0:T(1,128)}', space=vmem, size = 0x12000, scoped, tag = 'internal scratch']
  %s0 = inlined_call_operand.hbm [shape: f32[8], index: 0, kind: input, shape index: {}]
  %s1 = inlined_call_operand.hbm [shape: f32[8,64,128], index: 1, kind: output, shape index: {}]
  %s2 = sld [smem:[#allocation0]]
  $region41: #{tpu_custom_call.1} parent=0
    _
  %s4 = ssub.s32 1, %s2
  %s5 = scalar_select 0, %s4, %s2
  $region1: #{tpu_custom_call.1} parent=0
    #allocation2 [shape = 'u8[512]{0}', space=smem, size = 0x200, scoped, tag = 'input window, operand 0, single buffered']
    #allocation3 [shape = 's32[2]{0}', space=sflag, size = 0x8, scoped, tag = 'scoped memory for tpu_custom_call.1']
    #allocation4 [shape = 's32[2]{0}', space=sflag, size = 0x8, scoped, tag = 'scoped memory for tpu_custom_call.1']
    #allocation5 [shape = 'u8[65536]{0}', space=vmem, size = 0x10000, scoped, tag = 'output window, operand 0']
    %6 = vsyncpa [#allocation4], 0
    %7 = vsyncpa [#allocation3], 0
    %s8 = scalar_lea.sflag [#allocation3], 1
    %9 = vsyncpa %s8, 0
    loop: start=0, step=1, limit=10
    $region2: #{tpu_custom_call.1} parent=1 // loop_pre_header
      _
    $region3: #{tpu_custom_call.1} parent=1 // loop_header
      %s11 = sphi 0, %s15
      %p12 = scmp.ge.s32.totalorder %s11, 10
      %s19 = sphi 0, %s19
      %s21 = sphi 0, %s19
      %s22 = sphi 0, %s21
      %s36 = sphi 0, %s22
      %s42 = sphi 0, %s44
      %s45 = sphi 0, %s42
      %s46 = sphi 0, %s45
      %s62 = sphi 0, %s46
    $region4: #{tpu_custom_call.1} parent=1 // loop_header_branch
      %14 = sbr.rel (%p12) target = $region8
    $region5: #{tpu_custom_call.1} parent=1 // loop_body
      %s16 = ssub.s32 %s11, 1
      %s17 = ssub.s32 %s11, 2
      %s18 = sadd.s32 %s11, 1
      %s20 = sadd.s32 %s19, 1
      %p23 = scmp.eq.s32.totalorder %s11, 7
      %p24 = scmp.ne.s32.totalorder %s19, %s21
      %p25 = scmp.eq.s32.totalorder %s11, 0
      %p26 = por %p24, %p25
      %p27 = scmp.ne.s32.totalorder %s19, %s21
      %p28 = scmp.eq.s32.totalorder %s16, 7
      %p29 = por %p27, %p28
      %p30 = scmp.ne.s32.totalorder %s21, %s22
      %p31 = scmp.eq.s32.totalorder %s16, 0
      %p32 = por %p30, %p31
      %p33 = scmp.ne.s32.totalorder %s21, %s22
      %p34 = scmp.eq.s32.totalorder %s17, 7
      %p35 = por %p33, %p34
      %p37 = scmp.ne.s32.totalorder %s22, %s36
      %p38 = scmp.eq.s32.totalorder %s17, 0
      %p39 = por %p37, %p38
      %s40 = ssub.s32 %s11, %s18
      %p41 = scmp.eq.s32.totalorder %s40, 0
      %s43 = sadd.s32 %s42, 1
      %s44 = scalar_select %p41, %s42, %s43
      %p47 = pneg %p41
      %p48 = scmp.eq.s32.totalorder %s11, 7
      %p49 = por %p47, %p48
      %p50 = scmp.ne.s32.totalorder %s42, %s45
      %p51 = scmp.eq.s32.totalorder %s11, 0
      %p52 = por %p50, %p51
      %p53 = scmp.ne.s32.totalorder %s42, %s45
      %p54 = scmp.eq.s32.totalorder %s16, 7
      %p55 = por %p53, %p54
      %p56 = scmp.ne.s32.totalorder %s45, %s46
      %p57 = scmp.eq.s32.totalorder %s16, 0
      %p58 = por %p56, %p57
      %p59 = scmp.ne.s32.totalorder %s45, %s46
      %p60 = scmp.eq.s32.totalorder %s17, 7
      %p61 = por %p59, %p60
      %p63 = scmp.ne.s32.totalorder %s46, %s62
      %p64 = scmp.eq.s32.totalorder %s17, 0
      %p65 = por %p63, %p64
      %p66 = scmp.le.s32.totalorder 1, %s11
      %p67 = scmp.lt.s32.totalorder %s11, 9
      %p68 = pnand %p66, %p67
      %p69 = pneg %p68
      // Predicated region
      $region9: #{tpu_custom_call.1} parent=5 // pred_check
        _
      $region10: #{tpu_custom_call.1} parent=5 // pred_check_branch
        %71 = sbr.rel (%p68) target = $region12
      $region11: #{tpu_custom_call.1} parent=5 // pred_region
        %s72 = ssub.s32 %s11, 1
        // Predicated region
        $region13: #{tpu_custom_call.1} parent=11 // pred_check
          %p73 = pneg %p32
        $region14: #{tpu_custom_call.1} parent=11 // pred_check_branch
          %75 = sbr.rel (%p73) target = $region16
        $region15: #{tpu_custom_call.1} parent=11 // pred_region
          %s77 = ssub.s32 16, 16
          %78 = vsyncadd [#allocation4], %s77
          %81 = dma.hbm_to_smem %s0, 16, [#allocation2], [#allocation4]
        $region16: #{tpu_custom_call.1} parent=11 // pred_fallthru
          _
      $region12: #{tpu_custom_call.1} parent=5 // pred_fallthru
        _
      %p82 = scmp.lt.s32.totalorder %s11, 8
      // Predicated region
      $region17: #{tpu_custom_call.1} parent=5 // pred_check
        %p83 = pneg %p82
      $region18: #{tpu_custom_call.1} parent=5 // pred_check_branch
        %85 = sbr.rel (%p83) target = $region20
      $region19: #{tpu_custom_call.1} parent=5 // pred_region
        _
      $region20: #{tpu_custom_call.1} parent=5 // pred_fallthru
        _
      %p86 = scmp.le.s32.totalorder 1, %s11
      %p87 = scmp.lt.s32.totalorder %s11, 9
      %p88 = pnand %p86, %p87
      %p89 = pneg %p88
      // Predicated region
      $region21: #{tpu_custom_call.1} parent=5 // pred_check
        _
      $region22: #{tpu_custom_call.1} parent=5 // pred_check_branch
        %91 = sbr.rel (%p88) target = $region24
      $region23: #{tpu_custom_call.1} parent=5 // pred_region
        %s92 = ssub.s32 %s11, 1
        // Predicated region
        $region25: #{tpu_custom_call.1} parent=23 // pred_check
          %p93 = pneg %p32
        $region26: #{tpu_custom_call.1} parent=23 // pred_check_branch
          %95 = sbr.rel (%p93) target = $region28
        $region27: #{tpu_custom_call.1} parent=23 // pred_region
          %96 = dma.done [#allocation4], 16
        $region28: #{tpu_custom_call.1} parent=23 // pred_fallthru
          _
        %97 = sfence
        %p98 = pneg %p32
        %p99 = pneg %p29
        %p100 = pneg %p58
        %p101 = pneg %p55
        %s102 = sand.u32 %s45, 1
        %s103 = scalar_lea.sflag [#allocation3], %s102
        %s104 = sand.u32 %s45, 1
        %s105 = smul.addr %s104, 64
        %s106 = scalar_lea.vmem [#allocation5], %s105
        %v107 = vlaneseq
        %v108 = vshrl.u32 %v107, 7
        %v109 = vadd.s32 %v108, 8
        %v110 = vadd.s32 %v108, 16
        %v111 = vadd.s32 %v108, 24
        %v112 = vadd.s32 %v108, 32
        %v113 = vadd.s32 %v108, 40
        %v114 = vadd.s32 %v108, 48
        %v115 = vadd.s32 %v108, 56
        %v116 = vadd.s32 %v108, 64
        %v117 = vadd.s32 %v109, 64
        %v118 = vadd.s32 %v110, 64
        %v119 = vadd.s32 %v111, 64
        %v120 = vadd.s32 %v112, 64
        %v121 = vadd.s32 %v113, 64
        %v122 = vadd.s32 %v114, 64
        %v123 = vadd.s32 %v115, 64
        %v124 = vlaneseq
        %v125 = vand.u32 %v124, 127
        %v126 = vsub.s32 %v125, %v116
        %v127 = vsub.s32 %v125, %v117
        %v128 = vsub.s32 %v125, %v118
        %v129 = vsub.s32 %v125, %v119
        %v130 = vsub.s32 %v125, %v120
        %v131 = vsub.s32 %v125, %v121
        %v132 = vsub.s32 %v125, %v122
        %v133 = vsub.s32 %v125, %v123
        %vm134 = vcmp.lt.s32.totalorder %v126, 0
        %v135 = vsub.s32 0, %v126
        %v136 = vsel %vm134, %v135, %v126
        %vm137 = vcmp.lt.s32.totalorder %v127, 0
        %v138 = vsub.s32 0, %v127
        %v139 = vsel %vm137, %v138, %v127
        %vm140 = vcmp.lt.s32.totalorder %v128, 0
        %v141 = vsub.s32 0, %v128
        %v142 = vsel %vm140, %v141, %v128
        %vm143 = vcmp.lt.s32.totalorder %v129, 0
        %v144 = vsub.s32 0, %v129
        %v145 = vsel %vm143, %v144, %v129
        %vm146 = vcmp.lt.s32.totalorder %v130, 0
        %v147 = vsub.s32 0, %v130
        %v148 = vsel %vm146, %v147, %v130
        %vm149 = vcmp.lt.s32.totalorder %v131, 0
        %v150 = vsub.s32 0, %v131
        %v151 = vsel %vm149, %v150, %v131
        %vm152 = vcmp.lt.s32.totalorder %v132, 0
        %v153 = vsub.s32 0, %v132
        %v154 = vsel %vm152, %v153, %v132
        %vm155 = vcmp.lt.s32.totalorder %v133, 0
        %v156 = vsub.s32 0, %v133
        %v157 = vsel %vm155, %v156, %v133
        %v158 = vcvt.s32.f32 %v136
        %v159 = vcvt.s32.f32 %v139
        %v160 = vcvt.s32.f32 %v142
        %v161 = vcvt.s32.f32 %v145
        %v162 = vcvt.s32.f32 %v148
        %v163 = vcvt.s32.f32 %v151
        %v164 = vcvt.s32.f32 %v154
        %v165 = vcvt.s32.f32 %v157
        %v166 = vsub.f32 0.0, %v158
        %v167 = vsub.f32 0.0, %v159
        %v168 = vsub.f32 0.0, %v160
        %v169 = vsub.f32 0.0, %v161
        %v170 = vsub.f32 0.0, %v162
        %v171 = vsub.f32 0.0, %v163
        %v172 = vsub.f32 0.0, %v164
        %v173 = vsub.f32 0.0, %v165
        %s174 = sld [smem:[#allocation2 + %s16]]
        %v175 = vstv %s174
        %v176 = vmul.f32 %v166, %v175
        %v177 = vmul.f32 %v167, %v175
        %v178 = vmul.f32 %v168, %v175
        %v179 = vmul.f32 %v169, %v175
        %v180 = vmul.f32 %v170, %v175
        %v181 = vmul.f32 %v171, %v175
        %v182 = vmul.f32 %v172, %v175
        %v183 = vmul.f32 %v173, %v175
        %184 = vst [vmem:[%s106] sm:$0xff] %v176
        %185 = vst [vmem:[%s106 + $0x8] sm:$0xff] %v177
        %186 = vst [vmem:[%s106 + $0x10] sm:$0xff] %v178
        %187 = vst [vmem:[%s106 + $0x18] sm:$0xff] %v179
        %188 = vst [vmem:[%s106 + $0x20] sm:$0xff] %v180
        %189 = vst [vmem:[%s106 + $0x28] sm:$0xff] %v181
        %190 = vst [vmem:[%s106 + $0x30] sm:$0xff] %v182
        %191 = vst [vmem:[%s106 + $0x38] sm:$0xff] %v183
        %s192 = sand.u32 %s45, 1
        %s193 = scalar_lea.sflag [#allocation3], %s192
        %s194 = sand.u32 %s45, 1
        %s195 = smul.addr %s194, 64
        %s196 = scalar_lea.vmem [#allocation5], %s195
        // Predicated region
        $region29: #{tpu_custom_call.1} parent=23 // pred_check
          %p197 = pneg %p55
        $region30: #{tpu_custom_call.1} parent=23 // pred_check_branch
          %199 = sbr.rel (%p197) target = $region32
        $region31: #{tpu_custom_call.1} parent=23 // pred_region
          %s201 = ssub.s32 1024, 1024
          %202 = vsyncadd %s193, %s201
          %s203 = smul.addr %s16, 8
          %s204 = smul.addr %s203, 128
          %s205 = scalar_lea.hbm %s1, %s204
          %s206 = sshll.u32 %s196, 4
          %s207 = int_to_ptr.vmem [resolvable:$true] %s206
          %212 = dma.vmem_to_hbm [thread:$0]  %s207, 1024, %s205, %s193, 128, 128, 8
        $region32: #{tpu_custom_call.1} parent=23 // pred_fallthru
          _
      $region24: #{tpu_custom_call.1} parent=5 // pred_fallthru
        _
      %p213 = scmp.le.s32.totalorder 2, %s11
      // Predicated region
      $region33: #{tpu_custom_call.1} parent=5 // pred_check
        %p214 = pneg %p213
      $region34: #{tpu_custom_call.1} parent=5 // pred_check_branch
        %216 = sbr.rel (%p214) target = $region36
      $region35: #{tpu_custom_call.1} parent=5 // pred_region
        %s217 = ssub.s32 %s11, 2
        // Predicated region
        $region37: #{tpu_custom_call.1} parent=35 // pred_check
          %p218 = pneg %p61
        $region38: #{tpu_custom_call.1} parent=35 // pred_check_branch
          %220 = sbr.rel (%p218) target = $region40
        $region39: #{tpu_custom_call.1} parent=35 // pred_region
          %s221 = sand.u32 %s46, 1
          %s222 = scalar_lea.sflag [#allocation3], %s221
          %s223 = sand.u32 %s46, 1
          %s224 = smul.addr %s223, 64
          %s225 = scalar_lea.vmem [#allocation5], %s224
          %226 = dma.done %s222, 1024
        $region40: #{tpu_custom_call.1} parent=35 // pred_fallthru
          _
      $region36: #{tpu_custom_call.1} parent=5 // pred_fallthru
        _
    $region6: #{tpu_custom_call.1} parent=1 // loop_footer
      %s15 = sadd.s32 1, %s11
    $region7: #{tpu_custom_call.1} parent=1 // loop_footer_branch
      %10 = sbr.rel target = $region3
    $region8: #{tpu_custom_call.1} parent=1 // loop_exit
      _
    %227 = vsyncpa [#allocation3], 1
    %s228 = scalar_lea.sflag [#allocation3], 1
    %229 = vsyncpa %s228, 1
    %230 = vsyncpa [#allocation4], 1
    %s231 = scalar_lea.sflag [#allocation4], 1
    %232 = vsyncpa %s231, 1

</llo_original>
